<compile_context>
chip_gen: v5e
topology: v5e:2x2
jax: 0.10.0
libtpu: 0.0.40
codegen_flags: <defaults>
</compile_context>

<pallas_src>
import jax
import jax.numpy as jnp
from jax.experimental import pallas as pl
from jax.experimental.pallas import tpu as pltpu

HIDDEN = 256


def _critic_kernel(state_ref, action_ref,
                   w14s_ref, w14a_ref, b14_ref,
                   w2_hbm, b2_ref,
                   w5_hbm, b5_ref,
                   w3r_ref, w6r_ref, b36_ref,
                   q12_ref,
                   w2_vmem, w5_vmem, dma_sems):
    # ---- Prefetch layer-2 weights: overlap HBM->VMEM DMA with layer-1 compute.
    cp_w2 = pltpu.make_async_copy(w2_hbm, w2_vmem, dma_sems.at[0])
    cp_w5 = pltpu.make_async_copy(w5_hbm, w5_vmem, dma_sems.at[1])
    cp_w2.start()
    cp_w5.start()

    # ---- Fused layer 1 of both heads: sa @ [w1|w4] == s @ W[:sd] + a @ W[sd:]
    #      (no wrapper-side concat).  bf16 only at the MXU inputs; f32
    #      accumulation and f32 elementwise (v5e VPU has no bf16 ALU).
    s = state_ref[...].astype(jnp.bfloat16)            # (B, state_dim)
    a = action_ref[...].astype(jnp.bfloat16)           # (B, action_dim)
    h_both = (jnp.dot(s, w14s_ref[...], preferred_element_type=jnp.float32)
              + jnp.dot(a, w14a_ref[...], preferred_element_type=jnp.float32)
              + b14_ref[...])                          # (B, 512) f32
    h_both = jnp.maximum(h_both, 0.0)

    # Static lane slices at the 256 boundary (vreg-aligned, free).
    h1 = h_both[:, :HIDDEN].astype(jnp.bfloat16)
    h2 = h_both[:, HIDDEN:].astype(jnp.bfloat16)

    # ---- Layer 2 of each head; weights arrive via the prefetched DMA.
    cp_w2.wait()
    cp_w5.wait()
    h = jnp.maximum(
        jnp.dot(h1, w2_vmem[...], preferred_element_type=jnp.float32) + b2_ref[...],
        0.0)                                           # (B, 256) f32
    g = jnp.maximum(
        jnp.dot(h2, w5_vmem[...], preferred_element_type=jnp.float32) + b5_ref[...],
        0.0)                                           # (B, 256) f32

    # ---- Output layer on VPU/XLU (multiply + cross-lane reduce) instead of a
    #      third serialized MXU push/drain producing only 2 columns.
    q1 = jnp.sum(h * w3r_ref[...], axis=-1, keepdims=True)   # (B, 1)
    q2 = jnp.sum(g * w6r_ref[...], axis=-1, keepdims=True)   # (B, 1)
    q12_ref[...] = jnp.concatenate([q1, q2], axis=-1) + b36_ref[...]   # (B, 2)


def critic_forward(state, action, packed_params):
    """Pallas implementation of Critic.forward.

    Returns a fused (B, 2) array: column 0 = Q1, column 1 = Q2.  (Returned
    fused to avoid two extra tiny slice HLOs per call; callers that need the
    module's (q1, q2) tuple can view-split: q12[:, :1], q12[:, 1:].)
    """
    B = state.shape[0]
    D = state.shape[1] + action.shape[1]

    vmem = pl.BlockSpec(memory_space=pltpu.MemorySpace.VMEM)
    anyspec = pl.BlockSpec(memory_space=pl.ANY)
    # input order: state, action, w14s, w14a, b14, w2, b2, w5, b5, w3r, w6r, b36
    in_specs = [vmem, vmem,
                vmem, vmem, vmem,
                anyspec, vmem,
                anyspec, vmem,
                vmem, vmem, vmem]

    flops = 2 * B * (D * 2 * HIDDEN + 2 * HIDDEN * HIDDEN + 2 * HIDDEN)
    bytes_accessed = (sum(int(x.size) * x.dtype.itemsize
                          for x in (state, action) + tuple(packed_params))
                      + B * 2 * 4)

    q12 = pl.pallas_call(
        _critic_kernel,
        out_shape=jax.ShapeDtypeStruct((B, 2), jnp.float32),
        in_specs=in_specs,
        out_specs=vmem,
        scratch_shapes=[
            pltpu.VMEM((HIDDEN, HIDDEN), jnp.bfloat16),   # w2 landing buffer
            pltpu.VMEM((HIDDEN, HIDDEN), jnp.bfloat16),   # w5 landing buffer
            pltpu.SemaphoreType.DMA((2,)),
        ],
        cost_estimate=pl.CostEstimate(flops=flops, transcendentals=0,
                                      bytes_accessed=bytes_accessed),
    )(state, action, *packed_params)
    return q12


# --------------------------------------------------------------------------
# Parameter construction / packing
# --------------------------------------------------------------------------

def _init_linear(key, in_features, out_features):
    """nn.Linear default init: U(-1/sqrt(fan_in), 1/sqrt(fan_in)).
    Weight returned pre-transposed as (in_features, out_features)."""
    kw, kb = jax.random.split(key)
    bound = 1.0 / jnp.sqrt(jnp.float32(in_features))
    w = jax.random.uniform(kw, (in_features, out_features), jnp.float32,
                           minval=-bound, maxval=bound)
    b = jax.random.uniform(kb, (1, out_features), jnp.float32,
                           minval=-bound, maxval=bound)
    return w, b


def make_critic_params(key, state_dim, action_dim, hidden=HIDDEN):
    d = state_dim + action_dim
    keys = jax.random.split(key, 6)
    w1, b1 = _init_linear(keys[0], d, hidden)
    w2, b2 = _init_linear(keys[1], hidden, hidden)
    w3, b3 = _init_linear(keys[2], hidden, 1)
    w4, b4 = _init_linear(keys[3], d, hidden)
    w5, b5 = _init_linear(keys[4], hidden, hidden)
    w6, b6 = _init_linear(keys[5], hidden, 1)
    return (w1, b1, w2, b2, w3, b3, w4, b4, w5, b5, w6, b6)


def pack_critic_params(params, state_dim):
    """Build the fused / bf16 operands consumed by the kernel (host-side, once)."""
    (w1, b1, w2, b2, w3, b3, w4, b4, w5, b5, w6, b6) = params
    wdt = jnp.bfloat16

    # Fused layer-1 weight [w1 | w4], split into state-rows / action-rows.
    w14 = jnp.concatenate([w1, w4], axis=1)               # (D, 512)
    w14_s = w14[:state_dim].astype(wdt)                    # (state_dim, 512)
    w14_a = w14[state_dim:].astype(wdt)                    # (action_dim, 512)
    b14 = jnp.concatenate([b1, b4], axis=1)                # (1, 512) f32

    # Output layer as (1, 256) f32 rows (VPU multiply+reduce in the kernel).
    w3_row = w3.T                                          # (1, 256) f32
    w6_row = w6.T                                          # (1, 256) f32
    b36 = jnp.concatenate([b3, b6], axis=1)                # (1, 2) f32

    return (w14_s, w14_a, b14,
            w2.astype(wdt), b2,
            w5.astype(wdt), b5,
            w3_row, w6_row, b36)


# --------------------------------------------------------------------------
# Pure-JAX reference (same bf16 quantization of weights AND activations at the
# matmul inputs, f32 accumulation — apples-to-apples with the kernel).
# --------------------------------------------------------------------------

def _reference_forward(state, action, params):
    (w1, b1, w2, b2, w3, b3, w4, b4, w5, b5, w6, b6) = params

    def mm(x, w):
        return jnp.dot(x.astype(jnp.bfloat16), w.astype(jnp.bfloat16),
                       preferred_element_type=jnp.float32)

    sa = jnp.concatenate([state, action], axis=1)
    q1 = jnp.maximum(mm(sa, w1) + b1, 0.0)
    q1 = jnp.maximum(mm(q1, w2) + b2, 0.0)
    q1 = q1 @ w3 + b3                       # f32 output layer, like the kernel
    q2 = jnp.maximum(mm(sa, w4) + b4, 0.0)
    q2 = jnp.maximum(mm(q2, w5) + b5, 0.0)
    q2 = q2 @ w6 + b6
    return q1, q2


if __name__ == "__main__":
    state_dim, action_dim, batch = 12, 4, 8

    key = jax.random.PRNGKey(0)
    k_params, k_state, k_action = jax.random.split(key, 3)

    params = make_critic_params(k_params, state_dim, action_dim)
    packed = pack_critic_params(params, state_dim)
    state = jax.random.normal(k_state, (batch, state_dim), jnp.float32)
    action = jax.random.normal(k_action, (batch, action_dim), jnp.float32)

    q12 = critic_forward(state, action, packed)
    q12 = jax.block_until_ready(q12)
    q1, q2 = q12[:, :1], q12[:, 1:]          # module-style (B,1) views for checks

    q1_ref, q2_ref = _reference_forward(state, action, params)
    assert q12.shape == (batch, 2)
    assert q1.shape == (batch, 1) and q2.shape == (batch, 1)
    assert jnp.allclose(q1, q1_ref, atol=2e-2, rtol=2e-2)
    assert jnp.allclose(q2, q2_ref, atol=2e-2, rtol=2e-2)

    print("KERNEL_OK")
</pallas_src>

<mosaic_0001>
module attributes {stable_mosaic.version = 11 : i64} {
  func.func @_critic_kernel(%arg0: memref<8x12xf32, #tpu.memory_space<vmem>>, %arg1: memref<8x4xf32, #tpu.memory_space<vmem>>, %arg2: memref<12x512xbf16, #tpu.memory_space<vmem>>, %arg3: memref<4x512xbf16, #tpu.memory_space<vmem>>, %arg4: memref<1x512xf32, #tpu.memory_space<vmem>>, %arg5: memref<256x256xbf16, #tpu.memory_space<any>>, %arg6: memref<1x256xf32, #tpu.memory_space<vmem>>, %arg7: memref<256x256xbf16, #tpu.memory_space<any>>, %arg8: memref<1x256xf32, #tpu.memory_space<vmem>>, %arg9: memref<1x256xf32, #tpu.memory_space<vmem>>, %arg10: memref<1x256xf32, #tpu.memory_space<vmem>>, %arg11: memref<1x2xf32, #tpu.memory_space<vmem>>, %arg12: memref<8x2xf32, #tpu.memory_space<vmem>>, %arg13: memref<256x256xbf16, #tpu.memory_space<vmem>>, %arg14: memref<256x256xbf16, #tpu.memory_space<vmem>>, %arg15: memref<2x!tpu.dma_semaphore, #tpu.memory_space<semaphore_mem>>) attributes {dimension_semantics = [], scalar_prefetch = 0 : i64, scratch_operands = 3 : i64, tpu.core_type = #tpu.core_type<tc>} {
    %c0_i32 = arith.constant 0 : i32
    %0 = tpu.memref_slice %arg15[%c0_i32] : memref<2x!tpu.dma_semaphore, #tpu.memory_space<semaphore_mem>> -> memref<1x!tpu.dma_semaphore, #tpu.memory_space<semaphore_mem>>
    %1 = tpu.memref_squeeze %0 : memref<1x!tpu.dma_semaphore, #tpu.memory_space<semaphore_mem>> -> memref<!tpu.dma_semaphore, #tpu.memory_space<semaphore_mem>>
    tpu.enqueue_dma source(%arg5 : memref<256x256xbf16, #tpu.memory_space<any>>) target(%arg13 : memref<256x256xbf16, #tpu.memory_space<vmem>>) target_semaphore(%1 : memref<!tpu.dma_semaphore, #tpu.memory_space<semaphore_mem>>)
    %c1_i32 = arith.constant 1 : i32
    %2 = tpu.memref_slice %arg15[%c1_i32] : memref<2x!tpu.dma_semaphore, #tpu.memory_space<semaphore_mem>> -> memref<1x!tpu.dma_semaphore, #tpu.memory_space<semaphore_mem>>
    %3 = tpu.memref_squeeze %2 : memref<1x!tpu.dma_semaphore, #tpu.memory_space<semaphore_mem>> -> memref<!tpu.dma_semaphore, #tpu.memory_space<semaphore_mem>>
    tpu.enqueue_dma source(%arg7 : memref<256x256xbf16, #tpu.memory_space<any>>) target(%arg14 : memref<256x256xbf16, #tpu.memory_space<vmem>>) target_semaphore(%3 : memref<!tpu.dma_semaphore, #tpu.memory_space<semaphore_mem>>)
    %c0 = arith.constant 0 : index
    %c0_0 = arith.constant 0 : index
    %4 = vector.load %arg0[%c0, %c0_0] : memref<8x12xf32, #tpu.memory_space<vmem>>, vector<8x12xf32>
    %5 = arith.truncf %4 : vector<8x12xf32> to vector<8x12xbf16>
    %c0_1 = arith.constant 0 : index
    %c0_2 = arith.constant 0 : index
    %6 = vector.load %arg1[%c0_1, %c0_2] : memref<8x4xf32, #tpu.memory_space<vmem>>, vector<8x4xf32>
    %7 = arith.truncf %6 : vector<8x4xf32> to vector<8x4xbf16>
    %c0_3 = arith.constant 0 : index
    %c0_4 = arith.constant 0 : index
    %8 = vector.load %arg2[%c0_3, %c0_4] : memref<12x512xbf16, #tpu.memory_space<vmem>>, vector<12x512xbf16>
    %cst = arith.constant dense<0.000000e+00> : vector<8x512xf32>
    %9 = tpu.matmul %5, %8, %cst {dimension_numbers = #tpu.dot_dimension_numbers<[1], [0], [0], [1], [0, 0, 1, 1], [], []>} : vector<8x12xbf16>, vector<12x512xbf16>, vector<8x512xf32> -> vector<8x512xf32>
    %c0_5 = arith.constant 0 : index
    %c0_6 = arith.constant 0 : index
    %10 = vector.load %arg3[%c0_5, %c0_6] : memref<4x512xbf16, #tpu.memory_space<vmem>>, vector<4x512xbf16>
    %cst_7 = arith.constant dense<0.000000e+00> : vector<8x512xf32>
    %11 = tpu.matmul %7, %10, %cst_7 {dimension_numbers = #tpu.dot_dimension_numbers<[1], [0], [0], [1], [0, 0, 1, 1], [], []>} : vector<8x4xbf16>, vector<4x512xbf16>, vector<8x512xf32> -> vector<8x512xf32>
    %12 = arith.addf %9, %11 : vector<8x512xf32>
    %c0_8 = arith.constant 0 : index
    %c0_9 = arith.constant 0 : index
    %13 = vector.load %arg4[%c0_8, %c0_9] : memref<1x512xf32, #tpu.memory_space<vmem>>, vector<1x512xf32>
    %14 = vector.broadcast %13 : vector<1x512xf32> to vector<8x512xf32>
    %15 = arith.addf %12, %14 : vector<8x512xf32>
    %cst_10 = arith.constant 0.000000e+00 : f32
    %16 = vector.broadcast %cst_10 : f32 to vector<8x512xf32>
    %17 = arith.maximumf %15, %16 : vector<8x512xf32>
    %18 = vector.extract_strided_slice %17 {offsets = [0, 0], sizes = [8, 256], strides = [1, 1]} : vector<8x512xf32> to vector<8x256xf32>
    %19 = arith.truncf %18 : vector<8x256xf32> to vector<8x256xbf16>
    %20 = vector.extract_strided_slice %17 {offsets = [0, 256], sizes = [8, 256], strides = [1, 1]} : vector<8x512xf32> to vector<8x256xf32>
    %21 = arith.truncf %20 : vector<8x256xf32> to vector<8x256xbf16>
    %c0_i32_11 = arith.constant 0 : i32
    %22 = tpu.memref_slice %arg15[%c0_i32_11] : memref<2x!tpu.dma_semaphore, #tpu.memory_space<semaphore_mem>> -> memref<1x!tpu.dma_semaphore, #tpu.memory_space<semaphore_mem>>
    %23 = tpu.memref_squeeze %22 : memref<1x!tpu.dma_semaphore, #tpu.memory_space<semaphore_mem>> -> memref<!tpu.dma_semaphore, #tpu.memory_space<semaphore_mem>>
    tpu.wait_dma2 semaphore(%23 : memref<!tpu.dma_semaphore, #tpu.memory_space<semaphore_mem>>) src(%arg5 : memref<256x256xbf16, #tpu.memory_space<any>>) dst(%arg13 : memref<256x256xbf16, #tpu.memory_space<vmem>>)
    %c1_i32_12 = arith.constant 1 : i32
    %24 = tpu.memref_slice %arg15[%c1_i32_12] : memref<2x!tpu.dma_semaphore, #tpu.memory_space<semaphore_mem>> -> memref<1x!tpu.dma_semaphore, #tpu.memory_space<semaphore_mem>>
    %25 = tpu.memref_squeeze %24 : memref<1x!tpu.dma_semaphore, #tpu.memory_space<semaphore_mem>> -> memref<!tpu.dma_semaphore, #tpu.memory_space<semaphore_mem>>
    tpu.wait_dma2 semaphore(%25 : memref<!tpu.dma_semaphore, #tpu.memory_space<semaphore_mem>>) src(%arg7 : memref<256x256xbf16, #tpu.memory_space<any>>) dst(%arg14 : memref<256x256xbf16, #tpu.memory_space<vmem>>)
    %c0_13 = arith.constant 0 : index
    %c0_14 = arith.constant 0 : index
    %26 = vector.load %arg13[%c0_13, %c0_14] : memref<256x256xbf16, #tpu.memory_space<vmem>>, vector<256x256xbf16>
    %cst_15 = arith.constant dense<0.000000e+00> : vector<8x256xf32>
    %27 = tpu.matmul %19, %26, %cst_15 {dimension_numbers = #tpu.dot_dimension_numbers<[1], [0], [0], [1], [0, 0, 1, 1], [], []>} : vector<8x256xbf16>, vector<256x256xbf16>, vector<8x256xf32> -> vector<8x256xf32>
    %c0_16 = arith.constant 0 : index
    %c0_17 = arith.constant 0 : index
    %28 = vector.load %arg6[%c0_16, %c0_17] : memref<1x256xf32, #tpu.memory_space<vmem>>, vector<1x256xf32>
    %29 = vector.broadcast %28 : vector<1x256xf32> to vector<8x256xf32>
    %30 = arith.addf %27, %29 : vector<8x256xf32>
    %cst_18 = arith.constant 0.000000e+00 : f32
    %31 = vector.broadcast %cst_18 : f32 to vector<8x256xf32>
    %32 = arith.maximumf %30, %31 : vector<8x256xf32>
    %c0_19 = arith.constant 0 : index
    %c0_20 = arith.constant 0 : index
    %33 = vector.load %arg14[%c0_19, %c0_20] : memref<256x256xbf16, #tpu.memory_space<vmem>>, vector<256x256xbf16>
    %cst_21 = arith.constant dense<0.000000e+00> : vector<8x256xf32>
    %34 = tpu.matmul %21, %33, %cst_21 {dimension_numbers = #tpu.dot_dimension_numbers<[1], [0], [0], [1], [0, 0, 1, 1], [], []>} : vector<8x256xbf16>, vector<256x256xbf16>, vector<8x256xf32> -> vector<8x256xf32>
    %c0_22 = arith.constant 0 : index
    %c0_23 = arith.constant 0 : index
    %35 = vector.load %arg8[%c0_22, %c0_23] : memref<1x256xf32, #tpu.memory_space<vmem>>, vector<1x256xf32>
    %36 = vector.broadcast %35 : vector<1x256xf32> to vector<8x256xf32>
    %37 = arith.addf %34, %36 : vector<8x256xf32>
    %cst_24 = arith.constant 0.000000e+00 : f32
    %38 = vector.broadcast %cst_24 : f32 to vector<8x256xf32>
    %39 = arith.maximumf %37, %38 : vector<8x256xf32>
    %c0_25 = arith.constant 0 : index
    %c0_26 = arith.constant 0 : index
    %40 = vector.load %arg9[%c0_25, %c0_26] : memref<1x256xf32, #tpu.memory_space<vmem>>, vector<1x256xf32>
    %41 = vector.broadcast %40 : vector<1x256xf32> to vector<8x256xf32>
    %42 = arith.mulf %32, %41 : vector<8x256xf32>
    %cst_27 = arith.constant dense<0.000000e+00> : vector<8xf32>
    %43 = vector.multi_reduction <add>, %42, %cst_27 [1] : vector<8x256xf32> to vector<8xf32>
    %44 = vector.shape_cast %43 : vector<8xf32> to vector<8x1xf32>
    %c0_28 = arith.constant 0 : index
    %c0_29 = arith.constant 0 : index
    %45 = vector.load %arg10[%c0_28, %c0_29] : memref<1x256xf32, #tpu.memory_space<vmem>>, vector<1x256xf32>
    %46 = vector.broadcast %45 : vector<1x256xf32> to vector<8x256xf32>
    %47 = arith.mulf %39, %46 : vector<8x256xf32>
    %cst_30 = arith.constant dense<0.000000e+00> : vector<8xf32>
    %48 = vector.multi_reduction <add>, %47, %cst_30 [1] : vector<8x256xf32> to vector<8xf32>
    %49 = vector.shape_cast %48 : vector<8xf32> to vector<8x1xf32>
    %50 = tpu.concatenate %44, %49 in 1 : vector<8x1xf32>, vector<8x1xf32> -> vector<8x2xf32>
    %c0_31 = arith.constant 0 : index
    %c0_32 = arith.constant 0 : index
    %51 = vector.load %arg11[%c0_31, %c0_32] : memref<1x2xf32, #tpu.memory_space<vmem>>, vector<1x2xf32>
    %52 = vector.broadcast %51 : vector<1x2xf32> to vector<8x2xf32>
    %53 = arith.addf %50, %52 : vector<8x2xf32>
    %c0_33 = arith.constant 0 : index
    %c0_34 = arith.constant 0 : index
    %54 = vector.load %arg12[%c0_33, %c0_34] : memref<8x2xf32, #tpu.memory_space<vmem>>, vector<8x2xf32>
    tpu.vector_store %arg12[%c0_33, %c0_34], %53 {strides = array<i32>} : memref<8x2xf32, #tpu.memory_space<vmem>>, vector<8x2xf32>,
    return
  }
}

</mosaic_0001>

<llo_original>
// kernel: tpu_custom_call.1
$region0: #{tpu_custom_call.1}
  #allocation0 [shape = 'u32[]', space=smem, size = 0x4, offset = 0x4, fixed_abs, tag = 'smem constant byte address 0x4 - core index']
  #allocation1 [shape = 'u32[72,128]{1,0:T(1,128)}', space=vmem, size = 0x9000, scoped, tag = 'internal scratch']
  #allocation2 [shape = 'bf16[256,256]{1,0:T(8,128)(2,1)}', space=vmem, size = 0x20000, scoped, tag = 'scratch operand']
  #allocation3 [shape = 'bf16[256,256]{1,0:T(8,128)(2,1)}', space=vmem, size = 0x20000, scoped, tag = 'scratch operand']
  #allocation4 [shape = 's32[2]{0}', space=sflag, size = 0x8, scoped, tag = 'scratch operand']
  #allocation9 [shape = 's32[]', space=sflag, size = 0x4, offset = 0, fixed_abs, tag = 'sflag constant byte address 0x0 - dummy sync flag']
  #allocation10 [shape = 's32[]', space=sflag, size = 0x4, offset = 0, fixed_abs, tag = 'sflag constant byte address 0x0 - dummy sync flag']
  #allocation11 [shape = 'u32[]', space=smem, size = 0x4, offset = 0x44, fixed_abs, tag = 'smem constant byte address 0x44 - assertion arg 0']
  #allocation12 [shape = 'u32[]', space=smem, size = 0x4, offset = 0x48, fixed_abs, tag = 'smem constant byte address 0x48 - assertion arg 1']
  #allocation13 [shape = 's32[]', space=sflag, size = 0x4, offset = 0, fixed_abs, tag = 'sflag constant byte address 0x0 - dummy sync flag']
  #allocation14 [shape = 's32[]', space=sflag, size = 0x4, offset = 0, fixed_abs, tag = 'sflag constant byte address 0x0 - dummy sync flag']
  %s0 = inlined_call_operand.vmem [shape: f32[8,12], index: 0, kind: input, shape index: {}]
  %s1 = inlined_call_operand.vmem [shape: f32[8,4], index: 1, kind: input, shape index: {}]
  %s2 = inlined_call_operand.hbm [shape: bf16[12,512], index: 2, kind: input, shape index: {}]
  %s3 = inlined_call_operand.hbm [shape: bf16[4,512], index: 3, kind: input, shape index: {}]
  %s4 = inlined_call_operand.vmem [shape: f32[1,512], index: 4, kind: input, shape index: {}]
  %s5 = inlined_call_operand.hbm [shape: bf16[256,256], index: 5, kind: input, shape index: {}]
  %s6 = inlined_call_operand.vmem [shape: f32[1,256], index: 6, kind: input, shape index: {}]
  %s7 = inlined_call_operand.hbm [shape: bf16[256,256], index: 7, kind: input, shape index: {}]
  %s8 = inlined_call_operand.vmem [shape: f32[1,256], index: 8, kind: input, shape index: {}]
  %s9 = inlined_call_operand.vmem [shape: f32[1,256], index: 9, kind: input, shape index: {}]
  %s10 = inlined_call_operand.vmem [shape: f32[1,256], index: 10, kind: input, shape index: {}]
  %s11 = inlined_call_operand.vmem [shape: f32[1,2], index: 11, kind: input, shape index: {}]
  %s12 = inlined_call_operand.vmem [shape: f32[8,2], index: 12, kind: output, shape index: {}]
  %s13 = sld [smem:[#allocation0]]
  $region66: #{tpu_custom_call.1} parent=0
    _
  %s15 = ssub.s32 1, %s13
  %s16 = scalar_select 0, %s15, %s13
  $region1: #{tpu_custom_call.1} parent=0
    #allocation5 [shape = 'u8[16384]{0}', space=vmem, size = 0x4000, scoped, tag = 'input window, operand 2, single buffered']
    #allocation6 [shape = 's32[1]{0}', space=sflag, size = 0x4, scoped, tag = 'scoped memory for tpu_custom_call.1']
    #allocation7 [shape = 'u8[4096]{0}', space=vmem, size = 0x1000, scoped, tag = 'input window, operand 3, single buffered']
    #allocation8 [shape = 's32[1]{0}', space=sflag, size = 0x4, scoped, tag = 'scoped memory for tpu_custom_call.1']
    %17 = vsyncpa [#allocation6], 0
    %18 = vsyncpa [#allocation8], 0
    // Predicated region
    $region2: #{tpu_custom_call.1} parent=1 // pred_check
      _
    $region3: #{tpu_custom_call.1} parent=1 // pred_check_branch
      %20 = sbr.rel (0) target = $region5
    $region4: #{tpu_custom_call.1} parent=1 // pred_region
      _
    $region5: #{tpu_custom_call.1} parent=1 // pred_fallthru
      _
    // Predicated region
    $region6: #{tpu_custom_call.1} parent=1 // pred_check
      _
    $region7: #{tpu_custom_call.1} parent=1 // pred_check_branch
      %22 = sbr.rel (0) target = $region9
    $region8: #{tpu_custom_call.1} parent=1 // pred_region
      _
    $region9: #{tpu_custom_call.1} parent=1 // pred_fallthru
      _
    // Predicated region
    $region10: #{tpu_custom_call.1} parent=1 // pred_check
      _
    $region11: #{tpu_custom_call.1} parent=1 // pred_check_branch
      %24 = sbr.rel (0) target = $region13
    $region12: #{tpu_custom_call.1} parent=1 // pred_region
      %26 = vsyncadd [#allocation6], 0
      %s27 = sshll.u32 %s2, 4
      %s28 = int_to_ptr.hbm [resolvable:$true] %s27
      %s29 = sshll.u32 [#allocation5], 4
      %s30 = int_to_ptr.vmem [resolvable:$true] %s29
      %35 = dma.hbm_to_vmem [thread:$0]  %s28, 512, %s30, [#allocation6], 256, 256, 16
    $region13: #{tpu_custom_call.1} parent=1 // pred_fallthru
      _
    // Predicated region
    $region14: #{tpu_custom_call.1} parent=1 // pred_check
      _
    $region15: #{tpu_custom_call.1} parent=1 // pred_check_branch
      %37 = sbr.rel (0) target = $region17
    $region16: #{tpu_custom_call.1} parent=1 // pred_region
      %39 = vsyncadd [#allocation8], 0
      %s41 = sshll.u32 %s3, 4
      %s42 = int_to_ptr.hbm [resolvable:$true] %s41
      %s43 = sshll.u32 [#allocation7], 4
      %s44 = int_to_ptr.vmem [resolvable:$true] %s43
      %46 = dma.hbm_to_vmem [thread:$0]  %s42, 128, %s44, [#allocation8]
    $region17: #{tpu_custom_call.1} parent=1 // pred_fallthru
      _
    // Predicated region
    $region18: #{tpu_custom_call.1} parent=1 // pred_check
      _
    $region19: #{tpu_custom_call.1} parent=1 // pred_check_branch
      %48 = sbr.rel (0) target = $region21
    $region20: #{tpu_custom_call.1} parent=1 // pred_region
      _
    $region21: #{tpu_custom_call.1} parent=1 // pred_fallthru
      _
    // Predicated region
    $region22: #{tpu_custom_call.1} parent=1 // pred_check
      _
    $region23: #{tpu_custom_call.1} parent=1 // pred_check_branch
      %50 = sbr.rel (0) target = $region25
    $region24: #{tpu_custom_call.1} parent=1 // pred_region
      _
    $region25: #{tpu_custom_call.1} parent=1 // pred_fallthru
      _
    // Predicated region
    $region26: #{tpu_custom_call.1} parent=1 // pred_check
      _
    $region27: #{tpu_custom_call.1} parent=1 // pred_check_branch
      %52 = sbr.rel (0) target = $region29
    $region28: #{tpu_custom_call.1} parent=1 // pred_region
      _
    $region29: #{tpu_custom_call.1} parent=1 // pred_fallthru
      _
    // Predicated region
    $region30: #{tpu_custom_call.1} parent=1 // pred_check
      _
    $region31: #{tpu_custom_call.1} parent=1 // pred_check_branch
      %54 = sbr.rel (0) target = $region33
    $region32: #{tpu_custom_call.1} parent=1 // pred_region
      _
    $region33: #{tpu_custom_call.1} parent=1 // pred_fallthru
      _
    // Predicated region
    $region34: #{tpu_custom_call.1} parent=1 // pred_check
      _
    $region35: #{tpu_custom_call.1} parent=1 // pred_check_branch
      %56 = sbr.rel (0) target = $region37
    $region36: #{tpu_custom_call.1} parent=1 // pred_region
      _
    $region37: #{tpu_custom_call.1} parent=1 // pred_fallthru
      _
    // Predicated region
    $region38: #{tpu_custom_call.1} parent=1 // pred_check
      _
    $region39: #{tpu_custom_call.1} parent=1 // pred_check_branch
      %58 = sbr.rel (0) target = $region41
    $region40: #{tpu_custom_call.1} parent=1 // pred_region
      _
    $region41: #{tpu_custom_call.1} parent=1 // pred_fallthru
      _
    // Predicated region
    $region42: #{tpu_custom_call.1} parent=1 // pred_check
      _
    $region43: #{tpu_custom_call.1} parent=1 // pred_check_branch
      %60 = sbr.rel (0) target = $region45
    $region44: #{tpu_custom_call.1} parent=1 // pred_region
      %62 = dma.done [#allocation6], 512
    $region45: #{tpu_custom_call.1} parent=1 // pred_fallthru
      _
    // Predicated region
    $region46: #{tpu_custom_call.1} parent=1 // pred_check
      _
    $region47: #{tpu_custom_call.1} parent=1 // pred_check_branch
      %64 = sbr.rel (0) target = $region49
    $region48: #{tpu_custom_call.1} parent=1 // pred_region
      %66 = dma.done [#allocation8], 128
    $region49: #{tpu_custom_call.1} parent=1 // pred_fallthru
      _
    // Predicated region
    $region50: #{tpu_custom_call.1} parent=1 // pred_check
      _
    $region51: #{tpu_custom_call.1} parent=1 // pred_check_branch
      %69 = sbr.rel target = $region53
    $region52: #{tpu_custom_call.1} parent=1 // pred_region
      %70 = sst [smem:[#allocation11]] [#allocation10]
      %71 = sst [smem:[#allocation12]] [#allocation9]
    $region53: #{tpu_custom_call.1} parent=1 // pred_fallthru
      _
    %73 = shalt.err (0)
    %s75 = sshll.u32 %s5, 4
    %s76 = int_to_ptr.hbm [resolvable:$true] %s75
    %s77 = sshll.u32 [#allocation2], 4
    %s78 = int_to_ptr.vmem [resolvable:$true] %s77
    %80 = dma.hbm_to_vmem [thread:$0]  %s76, 4096, %s78, [#allocation4]
    %s81 = scalar_lea.sflag [#allocation4], 1
    // Predicated region
    $region54: #{tpu_custom_call.1} parent=1 // pred_check
      _
    $region55: #{tpu_custom_call.1} parent=1 // pred_check_branch
      %83 = sbr.rel target = $region57
    $region56: #{tpu_custom_call.1} parent=1 // pred_region
      %84 = sst [smem:[#allocation11]] [#allocation14]
      %85 = sst [smem:[#allocation12]] [#allocation13]
    $region57: #{tpu_custom_call.1} parent=1 // pred_fallthru
      _
    %87 = shalt.err (0)
    %s89 = sshll.u32 %s7, 4
    %s90 = int_to_ptr.hbm [resolvable:$true] %s89
    %s91 = sshll.u32 [#allocation3], 4
    %s92 = int_to_ptr.vmem [resolvable:$true] %s91
    %94 = dma.hbm_to_vmem [thread:$0]  %s90, 4096, %s92, %s81
    %v95 = vld [vmem:[%s0] sm:$0xff]
    %v96 = vpack.c.bf16 %v95, %v95
    %v97 = vld [vmem:[%s1] sm:$0xff]
    %v98 = vpack.c.bf16 %v97, %v97
    %v99 = vld [vmem:[#allocation5] sm:$0xff]
    %v100 = vld [vmem:[#allocation5 + $0x8] sm:$0xff]
    %v101 = vld [vmem:[#allocation5 + $0x10] sm:$0x33]
    %v102 = vld [vmem:[#allocation5 + $0x18] sm:$0x33]
    %v103 = vld [vmem:[#allocation7] sm:$0xff]
    %105 = vst [vmem:[#allocation1] ss:$4 sm:$0xff] %v103
    %v106 = vld.sshfl [vmem:[#allocation1] sm:$0xff pattern:$0x73625140]
    %v107 = vld.sshfl [vmem:[#allocation1 + $0x8] sm:$0xff pattern:$0x73625140]
    %v108 = vld.sshfl [vmem:[#allocation1 + $0x10] sm:$0xff pattern:$0x73625140]
    %v109 = vld.sshfl [vmem:[#allocation1 + $0x18] sm:$0xff pattern:$0x73625140]
    %vm110 = vcmask 31744
    %v112 = vsel %vm110, %v98, 0
    %vm114 = vcmask 1041408
    %v115 = vsel %vm114, %v106, 0
    %v117 = vsel %vm114, %v107, 0
    %v119 = vsel %vm114, %v108, 0
    %v121 = vsel %vm114, %v109, 0
    %123 = vmatpush.bf16.msra.mxu0 0
    %124 = vmatpush.bf16.msra.mxu0 0
    %125 = vmatpush.bf16.msra.mxu0 0
    %126 = vmatpush.bf16.msra.mxu0 0
    %127 = vmatpush.bf16.msra.mxu0 0
    %128 = vmatpush.bf16.msra.mxu0 0
    %129 = vmatpush.bf16.msra.mxu0 0
    %130 = vmatpush.bf16.msra.mxu0 %v115
    %131 = vmatmul.bf16.gmra.mxu0 %v112
    %v132 = vpop.f32.mrf.mxu0
    %v133 = vadd.f32 0.0, %v132
    %v134 = vpop.f32.mrf.mxu0
    %135 = vdwg.mxu0
    %136 = vmatpush.bf16.msra.mxu0 0
    %137 = vmatpush.bf16.msra.mxu0 0
    %138 = vmatpush.bf16.msra.mxu0 0
    %139 = vmatpush.bf16.msra.mxu0 0
    %140 = vmatpush.bf16.msra.mxu0 0
    %141 = vmatpush.bf16.msra.mxu0 0
    %142 = vmatpush.bf16.msra.mxu0 0
    %143 = vmatpush.bf16.msra.mxu0 %v117
    %144 = vmatmul.bf16.gmra.mxu0 %v112
    %v145 = vpop.f32.mrf.mxu0
    %v146 = vadd.f32 0.0, %v145
    %v147 = vpop.f32.mrf.mxu0
    %148 = vdwg.mxu0
    %149 = vmatpush.bf16.msra.mxu0 0
    %150 = vmatpush.bf16.msra.mxu0 0
    %151 = vmatpush.bf16.msra.mxu0 0
    %152 = vmatpush.bf16.msra.mxu0 0
    %153 = vmatpush.bf16.msra.mxu0 0
    %154 = vmatpush.bf16.msra.mxu0 0
    %155 = vmatpush.bf16.msra.mxu0 0
    %156 = vmatpush.bf16.msra.mxu0 %v119
    %157 = vmatmul.bf16.gmra.mxu0 %v112
    %v158 = vpop.f32.mrf.mxu0
    %v159 = vadd.f32 0.0, %v158
    %v160 = vpop.f32.mrf.mxu0
    %161 = vdwg.mxu0
    %162 = vmatpush.bf16.msra.mxu0 0
    %163 = vmatpush.bf16.msra.mxu0 0
    %164 = vmatpush.bf16.msra.mxu0 0
    %165 = vmatpush.bf16.msra.mxu0 0
    %166 = vmatpush.bf16.msra.mxu0 0
    %167 = vmatpush.bf16.msra.mxu0 0
    %168 = vmatpush.bf16.msra.mxu0 0
    %169 = vmatpush.bf16.msra.mxu0 %v121
    %170 = vmatmul.bf16.gmra.mxu0 %v112
    %v171 = vpop.f32.mrf.mxu0
    %v172 = vadd.f32 0.0, %v171
    %v173 = vpop.f32.mrf.mxu0
    %174 = vdwg.mxu0
    %v179 = vunpack.c.l.b16 %v99
    %v180 = vunpack.c.h.b16 %v99
    %v181 = vunpack.c.l.b16 %v100
    %v182 = vunpack.c.h.b16 %v100
    %v183 = vunpack.c.l.b16 %v101
    %v184 = vunpack.c.h.b16 %v101
    %v185 = vunpack.c.l.b16 %v102
    %v186 = vunpack.c.h.b16 %v102
    %v187 = vpack.c.b16 %v183, %v179
    %v188 = vpack.c.b16 %v184, %v180
    %v189 = vpack.c.b16 %v185, %v181
    %v190 = vpack.c.b16 %v186, %v182
    %vm191 = vcmask 97280
    %v193 = vsel %vm191, %v96, 0
    %vm195 = vcmask 1045504
    %v197 = vsel %vm195, %v187, 0
    %v200 = vsel %vm195, %v188, 0
    %v203 = vsel %vm195, %v189, 0
    %v206 = vsel %vm195, %v190, 0
    %208 = vmatpush.bf16.msra.mxu0 0
    %209 = vmatpush.bf16.msra.mxu0 0
    %210 = vmatpush.bf16.msra.mxu0 0
    %211 = vmatpush.bf16.msra.mxu0 0
    %212 = vmatpush.bf16.msra.mxu0 0
    %213 = vmatpush.bf16.msra.mxu0 0
    %214 = vmatpush.bf16.msra.mxu0 0
    %215 = vmatpush.bf16.msra.mxu0 %v197
    %216 = vmatmul.bf16.gmra.mxu0 %v193
    %v217 = vpop.f32.mrf.mxu0
    %v218 = vadd.f32 %v133, %v217
    %v219 = vpop.f32.mrf.mxu0
    %220 = vdwg.mxu0
    %221 = vmatpush.bf16.msra.mxu0 0
    %222 = vmatpush.bf16.msra.mxu0 0
    %223 = vmatpush.bf16.msra.mxu0 0
    %224 = vmatpush.bf16.msra.mxu0 0
    %225 = vmatpush.bf16.msra.mxu0 0
    %226 = vmatpush.bf16.msra.mxu0 0
    %227 = vmatpush.bf16.msra.mxu0 0
    %228 = vmatpush.bf16.msra.mxu0 %v200
    %229 = vmatmul.bf16.gmra.mxu0 %v193
    %v230 = vpop.f32.mrf.mxu0
    %v231 = vadd.f32 %v146, %v230
    %v232 = vpop.f32.mrf.mxu0
    %233 = vdwg.mxu0
    %234 = vmatpush.bf16.msra.mxu0 0
    %235 = vmatpush.bf16.msra.mxu0 0
    %236 = vmatpush.bf16.msra.mxu0 0
    %237 = vmatpush.bf16.msra.mxu0 0
    %238 = vmatpush.bf16.msra.mxu0 0
    %239 = vmatpush.bf16.msra.mxu0 0
    %240 = vmatpush.bf16.msra.mxu0 0
    %241 = vmatpush.bf16.msra.mxu0 %v203
    %242 = vmatmul.bf16.gmra.mxu0 %v193
    %v243 = vpop.f32.mrf.mxu0
    %v244 = vadd.f32 %v159, %v243
    %v245 = vpop.f32.mrf.mxu0
    %246 = vdwg.mxu0
    %247 = vmatpush.bf16.msra.mxu0 0
    %248 = vmatpush.bf16.msra.mxu0 0
    %249 = vmatpush.bf16.msra.mxu0 0
    %250 = vmatpush.bf16.msra.mxu0 0
    %251 = vmatpush.bf16.msra.mxu0 0
    %252 = vmatpush.bf16.msra.mxu0 0
    %253 = vmatpush.bf16.msra.mxu0 0
    %254 = vmatpush.bf16.msra.mxu0 %v206
    %255 = vmatmul.bf16.gmra.mxu0 %v193
    %v256 = vpop.f32.mrf.mxu0
    %v257 = vadd.f32 %v172, %v256
    %v258 = vpop.f32.mrf.mxu0
    %259 = vdwg.mxu0
    %v260 = vld [vmem:[%s4] sm:$0xf]
    %v262 = vperm.slane %v260, 0
    %v263 = vperm.slane %v260, 1
    %v264 = vperm.slane %v260, 2
    %v265 = vperm.slane %v260, 3
    %v270 = vadd.f32 %v218, %v262
    %v271 = vadd.f32 %v231, %v263
    %v272 = vadd.f32 %v244, %v264
    %v273 = vadd.f32 %v257, %v265
    %v274 = vmax.f32 %v270, 0.0
    %v275 = vmax.f32 %v271, 0.0
    %v276 = vmax.f32 %v272, 0.0
    %v277 = vmax.f32 %v273, 0.0
    %v278 = vpack.c.bf16 %v274, %v274
    %v279 = vpack.c.bf16 %v275, %v275
    %v280 = vpack.c.bf16 %v276, %v276
    %v281 = vpack.c.bf16 %v277, %v277
    %s282 = smul.u32 4, 32
    %s283 = smul.u32 %s282, 2
    %s284 = sshll.u32 %s283, 4
    %285 = dma.done [#allocation4], %s284
    %s286 = sshll.u32 %s283, 4
    %287 = dma.done %s81, %s286
    %v288 = vld [vmem:[#allocation2] sm:$0xff]
    %v289 = vld [vmem:[#allocation2 + $0x8] sm:$0xff]
    %v290 = vld [vmem:[#allocation2 + $0x10] sm:$0xff]
    %v291 = vld [vmem:[#allocation2 + $0x18] sm:$0xff]
    %v292 = vld [vmem:[#allocation2 + $0x20] sm:$0xff]
    %v293 = vld [vmem:[#allocation2 + $0x28] sm:$0xff]
    %v294 = vld [vmem:[#allocation2 + $0x30] sm:$0xff]
    %v295 = vld [vmem:[#allocation2 + $0x38] sm:$0xff]
    %v296 = vld [vmem:[#allocation2 + $0x40] sm:$0xff]
    %v297 = vld [vmem:[#allocation2 + $0x48] sm:$0xff]
    %v298 = vld [vmem:[#allocation2 + $0x50] sm:$0xff]
    %v299 = vld [vmem:[#allocation2 + $0x58] sm:$0xff]
    %v300 = vld [vmem:[#allocation2 + $0x60] sm:$0xff]
    %v301 = vld [vmem:[#allocation2 + $0x68] sm:$0xff]
    %v302 = vld [vmem:[#allocation2 + $0x70] sm:$0xff]
    %v303 = vld [vmem:[#allocation2 + $0x78] sm:$0xff]
    %v304 = vld [vmem:[#allocation2 + $0x80] sm:$0xff]
    %v305 = vld [vmem:[#allocation2 + $0x88] sm:$0xff]
    %v306 = vld [vmem:[#allocation2 + $0x90] sm:$0xff]
    %v307 = vld [vmem:[#allocation2 + $0x98] sm:$0xff]
    %v308 = vld [vmem:[#allocation2 + $0xa0] sm:$0xff]
    %v309 = vld [vmem:[#allocation2 + $0xa8] sm:$0xff]
    %v310 = vld [vmem:[#allocation2 + $0xb0] sm:$0xff]
    %v311 = vld [vmem:[#allocation2 + $0xb8] sm:$0xff]
    %v312 = vld [vmem:[#allocation2 + $0xc0] sm:$0xff]
    %v313 = vld [vmem:[#allocation2 + $0xc8] sm:$0xff]
    %v314 = vld [vmem:[#allocation2 + $0xd0] sm:$0xff]
    %v315 = vld [vmem:[#allocation2 + $0xd8] sm:$0xff]
    %v316 = vld [vmem:[#allocation2 + $0xe0] sm:$0xff]
    %v317 = vld [vmem:[#allocation2 + $0xe8] sm:$0xff]
    %v318 = vld [vmem:[#allocation2 + $0xf0] sm:$0xff]
    %v319 = vld [vmem:[#allocation2 + $0xf8] sm:$0xff]
    %v320 = vld [vmem:[%s6] sm:$0x3]
    %v322 = vperm.slane %v320, 0
    %v323 = vperm.slane %v320, 1
    %v358 = vunpack.c.l.b16 %v288
    %v359 = vunpack.c.h.b16 %v288
    %v360 = vunpack.c.l.b16 %v289
    %v361 = vunpack.c.h.b16 %v289
    %v362 = vunpack.c.l.b16 %v290
    %v363 = vunpack.c.h.b16 %v290
    %v364 = vunpack.c.l.b16 %v291
    %v365 = vunpack.c.h.b16 %v291
    %v366 = vunpack.c.l.b16 %v292
    %v367 = vunpack.c.h.b16 %v292
    %v368 = vunpack.c.l.b16 %v293
    %v369 = vunpack.c.h.b16 %v293
    %v370 = vunpack.c.l.b16 %v294
    %v371 = vunpack.c.h.b16 %v294
    %v372 = vunpack.c.l.b16 %v295
    %v373 = vunpack.c.h.b16 %v295
    %v374 = vunpack.c.l.b16 %v296
    %v375 = vunpack.c.h.b16 %v296
    %v376 = vunpack.c.l.b16 %v297
    %v377 = vunpack.c.h.b16 %v297
    %v378 = vunpack.c.l.b16 %v298
    %v379 = vunpack.c.h.b16 %v298
    %v380 = vunpack.c.l.b16 %v299
    %v381 = vunpack.c.h.b16 %v299
    %v382 = vunpack.c.l.b16 %v300
    %v383 = vunpack.c.h.b16 %v300
    %v384 = vunpack.c.l.b16 %v301
    %v385 = vunpack.c.h.b16 %v301
    %v386 = vunpack.c.l.b16 %v302
    %v387 = vunpack.c.h.b16 %v302
    %v388 = vunpack.c.l.b16 %v303
    %v389 = vunpack.c.h.b16 %v303
    %v390 = vunpack.c.l.b16 %v304
    %v391 = vunpack.c.h.b16 %v304
    %v392 = vunpack.c.l.b16 %v305
    %v393 = vunpack.c.h.b16 %v305
    %v394 = vunpack.c.l.b16 %v306
    %v395 = vunpack.c.h.b16 %v306
    %v396 = vunpack.c.l.b16 %v307
    %v397 = vunpack.c.h.b16 %v307
    %v398 = vunpack.c.l.b16 %v308
    %v399 = vunpack.c.h.b16 %v308
    %v400 = vunpack.c.l.b16 %v309
    %v401 = vunpack.c.h.b16 %v309
    %v402 = vunpack.c.l.b16 %v310
    %v403 = vunpack.c.h.b16 %v310
    %v404 = vunpack.c.l.b16 %v311
    %v405 = vunpack.c.h.b16 %v311
    %v406 = vunpack.c.l.b16 %v312
    %v407 = vunpack.c.h.b16 %v312
    %v408 = vunpack.c.l.b16 %v313
    %v409 = vunpack.c.h.b16 %v313
    %v410 = vunpack.c.l.b16 %v314
    %v411 = vunpack.c.h.b16 %v314
    %v412 = vunpack.c.l.b16 %v315
    %v413 = vunpack.c.h.b16 %v315
    %v414 = vunpack.c.l.b16 %v316
    %v415 = vunpack.c.h.b16 %v316
    %v416 = vunpack.c.l.b16 %v317
    %v417 = vunpack.c.h.b16 %v317
    %v418 = vunpack.c.l.b16 %v318
    %v419 = vunpack.c.h.b16 %v318
    %v420 = vunpack.c.l.b16 %v319
    %v421 = vunpack.c.h.b16 %v319
    %v422 = vpack.c.b16 %v360, %v358
    %v423 = vpack.c.b16 %v361, %v359
    %v424 = vpack.c.b16 %v364, %v362
    %v425 = vpack.c.b16 %v365, %v363
    %v426 = vpack.c.b16 %v368, %v366
    %v427 = vpack.c.b16 %v369, %v367
    %v428 = vpack.c.b16 %v372, %v370
    %v429 = vpack.c.b16 %v373, %v371
    %v430 = vpack.c.b16 %v376, %v374
    %v431 = vpack.c.b16 %v377, %v375
    %v432 = vpack.c.b16 %v380, %v378
    %v433 = vpack.c.b16 %v381, %v379
    %v434 = vpack.c.b16 %v384, %v382
    %v435 = vpack.c.b16 %v385, %v383
    %v436 = vpack.c.b16 %v388, %v386
    %v437 = vpack.c.b16 %v389, %v387
    %v438 = vpack.c.b16 %v392, %v390
    %v439 = vpack.c.b16 %v393, %v391
    %v440 = vpack.c.b16 %v396, %v394
    %v441 = vpack.c.b16 %v397, %v395
    %v442 = vpack.c.b16 %v400, %v398
    %v443 = vpack.c.b16 %v401, %v399
    %v444 = vpack.c.b16 %v404, %v402
    %v445 = vpack.c.b16 %v405, %v403
    %v446 = vpack.c.b16 %v408, %v406
    %v447 = vpack.c.b16 %v409, %v407
    %v448 = vpack.c.b16 %v412, %v410
    %v449 = vpack.c.b16 %v413, %v411
    %v450 = vpack.c.b16 %v416, %v414
    %v451 = vpack.c.b16 %v417, %v415
    %v452 = vpack.c.b16 %v420, %v418
    %v453 = vpack.c.b16 %v421, %v419
    %486 = vmatpush.bf16.msra.mxu0 %v436
    %487 = vmatpush.bf16.msra.mxu0 %v434
    %488 = vmatpush.bf16.msra.mxu0 %v432
    %489 = vmatpush.bf16.msra.mxu0 %v430
    %490 = vmatpush.bf16.msra.mxu0 %v428
    %491 = vmatpush.bf16.msra.mxu0 %v426
    %492 = vmatpush.bf16.msra.mxu0 %v424
    %493 = vmatpush.bf16.msra.mxu0 %v422
    %494 = vmatmul.bf16.gmra.mxu0 %v278
    %v495 = vpop.f32.mrf.mxu0
    %v496 = vadd.f32 %v322, %v495
    %v497 = vpop.f32.mrf.mxu0
    %498 = vdwg.mxu0
    %499 = vmatpush.bf16.msra.mxu0 %v452
    %500 = vmatpush.bf16.msra.mxu0 %v450
    %501 = vmatpush.bf16.msra.mxu0 %v448
    %502 = vmatpush.bf16.msra.mxu0 %v446
    %503 = vmatpush.bf16.msra.mxu0 %v444
    %504 = vmatpush.bf16.msra.mxu0 %v442
    %505 = vmatpush.bf16.msra.mxu0 %v440
    %506 = vmatpush.bf16.msra.mxu0 %v438
    %507 = vmatmul.bf16.gmra.mxu0 %v279
    %v508 = vpop.f32.mrf.mxu0
    %v509 = vadd.f32 %v496, %v508
    %v510 = vpop.f32.mrf.mxu0
    %511 = vdwg.mxu0
    %512 = vmatpush.bf16.msra.mxu0 %v437
    %513 = vmatpush.bf16.msra.mxu0 %v435
    %514 = vmatpush.bf16.msra.mxu0 %v433
    %515 = vmatpush.bf16.msra.mxu0 %v431
    %516 = vmatpush.bf16.msra.mxu0 %v429
    %517 = vmatpush.bf16.msra.mxu0 %v427
    %518 = vmatpush.bf16.msra.mxu0 %v425
    %519 = vmatpush.bf16.msra.mxu0 %v423
    %520 = vmatmul.bf16.gmra.mxu0 %v278
    %v521 = vpop.f32.mrf.mxu0
    %v522 = vadd.f32 %v323, %v521
    %v523 = vpop.f32.mrf.mxu0
    %524 = vdwg.mxu0
    %525 = vmatpush.bf16.msra.mxu0 %v453
    %526 = vmatpush.bf16.msra.mxu0 %v451
    %527 = vmatpush.bf16.msra.mxu0 %v449
    %528 = vmatpush.bf16.msra.mxu0 %v447
    %529 = vmatpush.bf16.msra.mxu0 %v445
    %530 = vmatpush.bf16.msra.mxu0 %v443
    %531 = vmatpush.bf16.msra.mxu0 %v441
    %532 = vmatpush.bf16.msra.mxu0 %v439
    %533 = vmatmul.bf16.gmra.mxu0 %v279
    %v534 = vpop.f32.mrf.mxu0
    %v535 = vadd.f32 %v522, %v534
    %v536 = vpop.f32.mrf.mxu0
    %537 = vdwg.mxu0
    %v538 = vmax.f32 %v509, 0.0
    %v539 = vmax.f32 %v535, 0.0
    %v540 = vld [vmem:[#allocation3] sm:$0xff]
    %v541 = vld [vmem:[#allocation3 + $0x8] sm:$0xff]
    %v542 = vld [vmem:[#allocation3 + $0x10] sm:$0xff]
    %v543 = vld [vmem:[#allocation3 + $0x18] sm:$0xff]
    %v544 = vld [vmem:[#allocation3 + $0x20] sm:$0xff]
    %v545 = vld [vmem:[#allocation3 + $0x28] sm:$0xff]
    %v546 = vld [vmem:[#allocation3 + $0x30] sm:$0xff]
    %v547 = vld [vmem:[#allocation3 + $0x38] sm:$0xff]
    %v548 = vld [vmem:[#allocation3 + $0x40] sm:$0xff]
    %v549 = vld [vmem:[#allocation3 + $0x48] sm:$0xff]
    %v550 = vld [vmem:[#allocation3 + $0x50] sm:$0xff]
    %v551 = vld [vmem:[#allocation3 + $0x58] sm:$0xff]
    %v552 = vld [vmem:[#allocation3 + $0x60] sm:$0xff]
    %v553 = vld [vmem:[#allocation3 + $0x68] sm:$0xff]
    %v554 = vld [vmem:[#allocation3 + $0x70] sm:$0xff]
    %v555 = vld [vmem:[#allocation3 + $0x78] sm:$0xff]
    %v556 = vld [vmem:[#allocation3 + $0x80] sm:$0xff]
    %v557 = vld [vmem:[#allocation3 + $0x88] sm:$0xff]
    %v558 = vld [vmem:[#allocation3 + $0x90] sm:$0xff]
    %v559 = vld [vmem:[#allocation3 + $0x98] sm:$0xff]
    %v560 = vld [vmem:[#allocation3 + $0xa0] sm:$0xff]
    %v561 = vld [vmem:[#allocation3 + $0xa8] sm:$0xff]
    %v562 = vld [vmem:[#allocation3 + $0xb0] sm:$0xff]
    %v563 = vld [vmem:[#allocation3 + $0xb8] sm:$0xff]
    %v564 = vld [vmem:[#allocation3 + $0xc0] sm:$0xff]
    %v565 = vld [vmem:[#allocation3 + $0xc8] sm:$0xff]
    %v566 = vld [vmem:[#allocation3 + $0xd0] sm:$0xff]
    %v567 = vld [vmem:[#allocation3 + $0xd8] sm:$0xff]
    %v568 = vld [vmem:[#allocation3 + $0xe0] sm:$0xff]
    %v569 = vld [vmem:[#allocation3 + $0xe8] sm:$0xff]
    %v570 = vld [vmem:[#allocation3 + $0xf0] sm:$0xff]
    %v571 = vld [vmem:[#allocation3 + $0xf8] sm:$0xff]
    %v572 = vld [vmem:[%s8] sm:$0x3]
    %v574 = vperm.slane %v572, 0
    %v575 = vperm.slane %v572, 1
    %v610 = vunpack.c.l.b16 %v540
    %v611 = vunpack.c.h.b16 %v540
    %v612 = vunpack.c.l.b16 %v541
    %v613 = vunpack.c.h.b16 %v541
    %v614 = vunpack.c.l.b16 %v542
    %v615 = vunpack.c.h.b16 %v542
    %v616 = vunpack.c.l.b16 %v543
    %v617 = vunpack.c.h.b16 %v543
    %v618 = vunpack.c.l.b16 %v544
    %v619 = vunpack.c.h.b16 %v544
    %v620 = vunpack.c.l.b16 %v545
    %v621 = vunpack.c.h.b16 %v545
    %v622 = vunpack.c.l.b16 %v546
    %v623 = vunpack.c.h.b16 %v546
    %v624 = vunpack.c.l.b16 %v547
    %v625 = vunpack.c.h.b16 %v547
    %v626 = vunpack.c.l.b16 %v548
    %v627 = vunpack.c.h.b16 %v548
    %v628 = vunpack.c.l.b16 %v549
    %v629 = vunpack.c.h.b16 %v549
    %v630 = vunpack.c.l.b16 %v550
    %v631 = vunpack.c.h.b16 %v550
    %v632 = vunpack.c.l.b16 %v551
    %v633 = vunpack.c.h.b16 %v551
    %v634 = vunpack.c.l.b16 %v552
    %v635 = vunpack.c.h.b16 %v552
    %v636 = vunpack.c.l.b16 %v553
    %v637 = vunpack.c.h.b16 %v553
    %v638 = vunpack.c.l.b16 %v554
    %v639 = vunpack.c.h.b16 %v554
    %v640 = vunpack.c.l.b16 %v555
    %v641 = vunpack.c.h.b16 %v555
    %v642 = vunpack.c.l.b16 %v556
    %v643 = vunpack.c.h.b16 %v556
    %v644 = vunpack.c.l.b16 %v557
    %v645 = vunpack.c.h.b16 %v557
    %v646 = vunpack.c.l.b16 %v558
    %v647 = vunpack.c.h.b16 %v558
    %v648 = vunpack.c.l.b16 %v559
    %v649 = vunpack.c.h.b16 %v559
    %v650 = vunpack.c.l.b16 %v560
    %v651 = vunpack.c.h.b16 %v560
    %v652 = vunpack.c.l.b16 %v561
    %v653 = vunpack.c.h.b16 %v561
    %v654 = vunpack.c.l.b16 %v562
    %v655 = vunpack.c.h.b16 %v562
    %v656 = vunpack.c.l.b16 %v563
    %v657 = vunpack.c.h.b16 %v563
    %v658 = vunpack.c.l.b16 %v564
    %v659 = vunpack.c.h.b16 %v564
    %v660 = vunpack.c.l.b16 %v565
    %v661 = vunpack.c.h.b16 %v565
    %v662 = vunpack.c.l.b16 %v566
    %v663 = vunpack.c.h.b16 %v566
    %v664 = vunpack.c.l.b16 %v567
    %v665 = vunpack.c.h.b16 %v567
    %v666 = vunpack.c.l.b16 %v568
    %v667 = vunpack.c.h.b16 %v568
    %v668 = vunpack.c.l.b16 %v569
    %v669 = vunpack.c.h.b16 %v569
    %v670 = vunpack.c.l.b16 %v570
    %v671 = vunpack.c.h.b16 %v570
    %v672 = vunpack.c.l.b16 %v571
    %v673 = vunpack.c.h.b16 %v571
    %v674 = vpack.c.b16 %v612, %v610
    %v675 = vpack.c.b16 %v613, %v611
    %v676 = vpack.c.b16 %v616, %v614
    %v677 = vpack.c.b16 %v617, %v615
    %v678 = vpack.c.b16 %v620, %v618
    %v679 = vpack.c.b16 %v621, %v619
    %v680 = vpack.c.b16 %v624, %v622
    %v681 = vpack.c.b16 %v625, %v623
    %v682 = vpack.c.b16 %v628, %v626
    %v683 = vpack.c.b16 %v629, %v627
    %v684 = vpack.c.b16 %v632, %v630
    %v685 = vpack.c.b16 %v633, %v631
    %v686 = vpack.c.b16 %v636, %v634
    %v687 = vpack.c.b16 %v637, %v635
    %v688 = vpack.c.b16 %v640, %v638
    %v689 = vpack.c.b16 %v641, %v639
    %v690 = vpack.c.b16 %v644, %v642
    %v691 = vpack.c.b16 %v645, %v643
    %v692 = vpack.c.b16 %v648, %v646
    %v693 = vpack.c.b16 %v649, %v647
    %v694 = vpack.c.b16 %v652, %v650
    %v695 = vpack.c.b16 %v653, %v651
    %v696 = vpack.c.b16 %v656, %v654
    %v697 = vpack.c.b16 %v657, %v655
    %v698 = vpack.c.b16 %v660, %v658
    %v699 = vpack.c.b16 %v661, %v659
    %v700 = vpack.c.b16 %v664, %v662
    %v701 = vpack.c.b16 %v665, %v663
    %v702 = vpack.c.b16 %v668, %v666
    %v703 = vpack.c.b16 %v669, %v667
    %v704 = vpack.c.b16 %v672, %v670
    %v705 = vpack.c.b16 %v673, %v671
    %738 = vmatpush.bf16.msra.mxu0 %v688
    %739 = vmatpush.bf16.msra.mxu0 %v686
    %740 = vmatpush.bf16.msra.mxu0 %v684
    %741 = vmatpush.bf16.msra.mxu0 %v682
    %742 = vmatpush.bf16.msra.mxu0 %v680
    %743 = vmatpush.bf16.msra.mxu0 %v678
    %744 = vmatpush.bf16.msra.mxu0 %v676
    %745 = vmatpush.bf16.msra.mxu0 %v674
    %746 = vmatmul.bf16.gmra.mxu0 %v280
    %v747 = vpop.f32.mrf.mxu0
    %v748 = vadd.f32 %v574, %v747
    %v749 = vpop.f32.mrf.mxu0
    %750 = vdwg.mxu0
    %751 = vmatpush.bf16.msra.mxu0 %v704
    %752 = vmatpush.bf16.msra.mxu0 %v702
    %753 = vmatpush.bf16.msra.mxu0 %v700
    %754 = vmatpush.bf16.msra.mxu0 %v698
    %755 = vmatpush.bf16.msra.mxu0 %v696
    %756 = vmatpush.bf16.msra.mxu0 %v694
    %757 = vmatpush.bf16.msra.mxu0 %v692
    %758 = vmatpush.bf16.msra.mxu0 %v690
    %759 = vmatmul.bf16.gmra.mxu0 %v281
    %v760 = vpop.f32.mrf.mxu0
    %v761 = vadd.f32 %v748, %v760
    %v762 = vpop.f32.mrf.mxu0
    %763 = vdwg.mxu0
    %764 = vmatpush.bf16.msra.mxu0 %v689
    %765 = vmatpush.bf16.msra.mxu0 %v687
    %766 = vmatpush.bf16.msra.mxu0 %v685
    %767 = vmatpush.bf16.msra.mxu0 %v683
    %768 = vmatpush.bf16.msra.mxu0 %v681
    %769 = vmatpush.bf16.msra.mxu0 %v679
    %770 = vmatpush.bf16.msra.mxu0 %v677
    %771 = vmatpush.bf16.msra.mxu0 %v675
    %772 = vmatmul.bf16.gmra.mxu0 %v280
    %v773 = vpop.f32.mrf.mxu0
    %v774 = vadd.f32 %v575, %v773
    %v775 = vpop.f32.mrf.mxu0
    %776 = vdwg.mxu0
    %777 = vmatpush.bf16.msra.mxu0 %v705
    %778 = vmatpush.bf16.msra.mxu0 %v703
    %779 = vmatpush.bf16.msra.mxu0 %v701
    %780 = vmatpush.bf16.msra.mxu0 %v699
    %781 = vmatpush.bf16.msra.mxu0 %v697
    %782 = vmatpush.bf16.msra.mxu0 %v695
    %783 = vmatpush.bf16.msra.mxu0 %v693
    %784 = vmatpush.bf16.msra.mxu0 %v691
    %785 = vmatmul.bf16.gmra.mxu0 %v281
    %v786 = vpop.f32.mrf.mxu0
    %v787 = vadd.f32 %v774, %v786
    %v788 = vpop.f32.mrf.mxu0
    %789 = vdwg.mxu0
    %v790 = vmax.f32 %v761, 0.0
    %v791 = vmax.f32 %v787, 0.0
    %v792 = vld [vmem:[%s9] sm:$0x3]
    %v794 = vperm.slane %v792, 0
    %v795 = vperm.slane %v792, 1
    %v798 = vmul.f32 %v538, %v794
    %v799 = vmul.f32 %v539, %v795
    %v800 = vadd.f32 %v798, %v799
    %801 = vadd.xlane.f32.xlu0 %v800
    %v802 = vpop.xlane.xlu0 %801
    %v803 = vld [vmem:[%s10] sm:$0x3]
    %v805 = vperm.slane %v803, 0
    %v806 = vperm.slane %v803, 1
    %v809 = vmul.f32 %v790, %v805
    %v810 = vmul.f32 %v791, %v806
    %v811 = vadd.f32 %v809, %v810
    %812 = vadd.xlane.f32.xlu0 %v811
    %v813 = vpop.xlane.xlu0 %812
    %vm814 = vcmask 7168
    %v815 = vsel %vm814, %v802, %v813
    %v816 = vld [vmem:[%s11] sm:$0x1]
    %v818 = vperm.slane %v816, 0
    %v820 = vadd.f32 %v815, %v818
    %vm821 = vcmask 15360
    %822 = vst.msk [vmem:[%s12] sm:$0xff] %vm821, %v820
    // Predicated region
    $region58: #{tpu_custom_call.1} parent=1 // pred_check
      _
    $region59: #{tpu_custom_call.1} parent=1 // pred_check_branch
      %824 = sbr.rel (0) target = $region61
    $region60: #{tpu_custom_call.1} parent=1 // pred_region
      _
    $region61: #{tpu_custom_call.1} parent=1 // pred_fallthru
      _
    // Predicated region
    $region62: #{tpu_custom_call.1} parent=1 // pred_check
      _
    $region63: #{tpu_custom_call.1} parent=1 // pred_check_branch
      %826 = sbr.rel (0) target = $region65
    $region64: #{tpu_custom_call.1} parent=1 // pred_region
      _
    $region65: #{tpu_custom_call.1} parent=1 // pred_fallthru
      _
    %827 = vsyncpa [#allocation6], 1
    %828 = vsyncpa [#allocation8], 1
  %829 = vsyncmov [#allocation4]
  %s830 = vpop.sfrf %829
  %p831 = scmp.eq.s32.totalorder %s830, 0
  %p832 = pneg %p831
  %834 = shalt.err (%p832)
  %s835 = scalar_lea.sflag [#allocation4], 1
  %836 = vsyncmov %s835
  %s837 = vpop.sfrf %836
  %p838 = scmp.eq.s32.totalorder %s837, 0
  %p839 = pneg %p838
  %841 = shalt.err (%p839)

</llo_original>
